<compile_context>
chip_gen: v7x
topology: tpu7x:2x2x1
jax: 0.10.0
libtpu: 0.0.40
codegen_flags: <defaults>
</compile_context>

<pallas_src>
import functools

import jax
import jax.numpy as jnp
from jax import lax
from jax.experimental import pallas as pl
from jax.experimental.pallas import tpu as pltpu

NEG_SLOPE = 0.01  # nn.LeakyReLU default negative_slope


def _round_up(x, m):
    return ((x + m - 1) // m) * m


def _chip_config():
    """Per-generation tiling / VMEM budget. Conservative for unknown chips."""
    try:
        kind = jax.devices()[0].device_kind.lower()
    except Exception:  # pragma: no cover - no devices at trace time
        kind = ""
    if "v7" in kind:
        # 64 MiB physical VMEM, 3.2 TB/s HBM: bigger tiles amortize the
        # ~0.35us/step overhead; raise the scoped limit (default 32 MiB).
        return dict(tile_rows=2048, vmem_limit_bytes=48 << 20,
                    two_tc=True, bf16_valu=True)
    if "v6" in kind:
        return dict(tile_rows=1024, vmem_limit_bytes=None,
                    two_tc=False, bf16_valu=True)
    # v5e (16 MiB scoped-VMEM default) / older / unknown: stay small.
    return dict(tile_rows=512, vmem_limit_bytes=None,
                two_tc=False, bf16_valu=False)


def _pick_strip(tn):
    """Largest multiple-of-8 divisor of tn that is <= 256 (row-strip size)."""
    if tn <= 256:
        return tn
    for c in range(256, 7, -8):
        if tn % c == 0:
            return c
    return tn


def _pixelwise_linears_kernel(x_ref, w_ref, b_ref, o_ref, *,
                              num_layers, strip_rows, compute_dtype):
    # x_ref/o_ref: (TN, HW)   w_ref/b_ref: (L, 1, HW)
    n_strips = x_ref.shape[0] // strip_rows

    # Hoist the (tiny) per-layer params once; (1, HW) sublane-broadcasts over
    # the strip rows, so no materialized (strip, HW) copies are needed.
    params = [(w_ref[l].astype(compute_dtype), b_ref[l].astype(compute_dtype))
              for l in range(num_layers)]

    def strip_body(s, carry):
        r0 = pl.multiple_of(s * strip_rows, strip_rows)
        x = x_ref[pl.ds(r0, strip_rows), :].astype(compute_dtype)
        for w, b in params:  # whole layer chain stays in-register per strip
            x = x * w + b
            x = jnp.maximum(x, NEG_SLOPE * x)  # LeakyReLU (0 < slope < 1)
        o_ref[pl.ds(r0, strip_rows), :] = x.astype(o_ref.dtype)
        return carry

    lax.fori_loop(0, n_strips, strip_body, 0, unroll=True)


def pixelwise_linears(x_beta, Ws, biases, *, tile_rows=None,
                      small_input_fallback=False):
    """x_beta: (B, C, H, W); Ws, biases: (L, H, W). Returns (B, C, H, W)."""
    B, C, H, W = x_beta.shape
    L = Ws.shape[0]
    HW = H * W
    N = B * C

    # Tiny inputs: a fused XLA elementwise chain beats kernel-launch overhead.
    if small_input_fallback and x_beta.size * x_beta.dtype.itemsize < (1 << 20):
        return _reference(x_beta, Ws, biases)

    cfg = _chip_config()
    target_rows = tile_rows if tile_rows is not None else cfg["tile_rows"]

    # Compute dtype: f32 unless the I/O is already bf16 AND the chip has a
    # bf16 VALU (v6e/v7x). On v5e bf16 I/O still halves HBM traffic but the
    # math stays f32.
    if x_beta.dtype == jnp.bfloat16 and cfg["bf16_valu"]:
        compute_dtype = jnp.bfloat16
    else:
        compute_dtype = jnp.float32

    # Free, contiguous reshapes into the lane-dense layout.
    x_flat = x_beta.reshape(N, HW)
    w_flat = Ws.reshape(L, 1, HW)
    b_flat = biases.reshape(L, 1, HW)

    # N-tile: multiple of 8 sublanes, capped by the per-chip VMEM budget.
    TN = min(target_rows, _round_up(N, 8))
    TN = max(8, (TN // 8) * 8)
    # On a two-TensorCore chip make sure there are >=2 grid steps so both
    # cores (and both DMA streams) get work.
    if cfg["two_tc"] and N >= 16:
        TN = min(TN, max(8, _round_up((N + 1) // 2, 8)))

    num_tiles = pl.cdiv(N, TN)
    grid = (num_tiles,)
    strip_rows = _pick_strip(TN)

    if cfg["two_tc"] and num_tiles >= 2:
        dim_sem = (getattr(pltpu, "CORE_PARALLEL", "parallel"),)
    else:
        dim_sem = ("parallel",)

    kernel = functools.partial(
        _pixelwise_linears_kernel,
        num_layers=L, strip_rows=strip_rows, compute_dtype=compute_dtype)

    out_flat = pl.pallas_call(
        kernel,
        out_shape=jax.ShapeDtypeStruct((N, HW), x_beta.dtype),
        grid=grid,
        in_specs=[
            pl.BlockSpec((TN, HW), lambda i: (i, 0)),
            # Params are tiny; constant index_map keeps them VMEM-resident.
            pl.BlockSpec((L, 1, HW), lambda i: (0, 0, 0)),
            pl.BlockSpec((L, 1, HW), lambda i: (0, 0, 0)),
        ],
        out_specs=pl.BlockSpec((TN, HW), lambda i: (i, 0)),
        # Output may reuse x's HBM buffer (pure streaming, block-aligned).
        input_output_aliases={0: 0},
        compiler_params=pltpu.CompilerParams(
            dimension_semantics=dim_sem,
            vmem_limit_bytes=cfg["vmem_limit_bytes"],
        ),
    )(x_flat, w_flat, b_flat)

    return out_flat.reshape(B, C, H, W)


def _reference(x_beta, Ws, biases):
    x = x_beta.astype(jnp.float32)
    for l in range(Ws.shape[0]):
        x = x * Ws[l] + biases[l]
        x = jnp.where(x >= 0.0, x, NEG_SLOPE * x)
    return x.astype(x_beta.dtype)


if __name__ == "__main__":
    key = jax.random.PRNGKey(0)
    k_x, k_w, k_b, k_x2 = jax.random.split(key, 4)

    width = 25          # SinglePixelLinear default width
    num_layers = 3

    # Parameter shapes from SinglePixelLinear.__init__: (width, width) per
    # layer. Deterministic synthetic init (not a checkpoint load).
    Ws = jax.random.normal(k_w, (num_layers, width, width), dtype=jnp.float32)
    biases = jax.random.normal(k_b, (num_layers, width, width), dtype=jnp.float32)

    # Case 1: module-default small shapes.
    x1 = jax.random.normal(k_x, (2, 4, width, width), dtype=jnp.float32)
    out1 = pixelwise_linears(x1, Ws, biases)
    jax.block_until_ready(out1)
    ref1 = _reference(x1, Ws, biases)
    assert out1.shape == x1.shape and out1.dtype == x1.dtype
    assert jnp.allclose(out1, ref1, atol=1e-5, rtol=1e-5)

    # Case 2: enough rows to exercise the tiled grid and remainder clipping.
    x2 = jax.random.normal(k_x2, (8, 160, width, width), dtype=jnp.float32)
    out2 = pixelwise_linears(x2, Ws, biases)
    jax.block_until_ready(out2)
    ref2 = _reference(x2, Ws, biases)
    assert out2.shape == x2.shape and out2.dtype == x2.dtype
    assert jnp.allclose(out2, ref2, atol=1e-5, rtol=1e-5)

    print("KERNEL_OK")
</pallas_src>

<mosaic_0001>
module attributes {stable_mosaic.version = 11 : i64} {
  func.func @_pixelwise_linears_kernel(%arg0: i32, %arg1: memref<8x625xf32, #tpu.memory_space<vmem>>, %arg2: memref<3x1x625xf32, #tpu.memory_space<vmem>>, %arg3: memref<3x1x625xf32, #tpu.memory_space<vmem>>, %arg4: memref<8x625xf32, #tpu.memory_space<vmem>>) attributes {dimension_semantics = [#tpu.dimension_semantics<parallel>], iteration_bounds = array<i64: 1>, scalar_prefetch = 0 : i64, scratch_operands = 0 : i64, tpu.core_type = #tpu.core_type<tc>, window_params = [{transform_indices = @transform_0, window_bounds = array<i64: 8, 625>}, {pipeline_mode = #tpu.pipeline_mode<synchronous>, transform_indices = @transform_1, window_bounds = array<i64: 3, 1, 625>}, {pipeline_mode = #tpu.pipeline_mode<synchronous>, transform_indices = @transform_2, window_bounds = array<i64: 3, 1, 625>}, {transform_indices = @transform_3, window_bounds = array<i64: 8, 625>}]} {
    %c0 = arith.constant 0 : index
    %c0_0 = arith.constant 0 : index
    %c0_1 = arith.constant 0 : index
    %0 = vector.load %arg2[%c0, %c0_0, %c0_1] : memref<3x1x625xf32, #tpu.memory_space<vmem>>, vector<1x1x625xf32>
    %1 = vector.shape_cast %0 : vector<1x1x625xf32> to vector<1x625xf32>
    %c0_2 = arith.constant 0 : index
    %c0_3 = arith.constant 0 : index
    %c0_4 = arith.constant 0 : index
    %2 = vector.load %arg3[%c0_2, %c0_3, %c0_4] : memref<3x1x625xf32, #tpu.memory_space<vmem>>, vector<1x1x625xf32>
    %3 = vector.shape_cast %2 : vector<1x1x625xf32> to vector<1x625xf32>
    %c1 = arith.constant 1 : index
    %c0_5 = arith.constant 0 : index
    %c0_6 = arith.constant 0 : index
    %4 = vector.load %arg2[%c1, %c0_5, %c0_6] : memref<3x1x625xf32, #tpu.memory_space<vmem>>, vector<1x1x625xf32>
    %5 = vector.shape_cast %4 : vector<1x1x625xf32> to vector<1x625xf32>
    %c1_7 = arith.constant 1 : index
    %c0_8 = arith.constant 0 : index
    %c0_9 = arith.constant 0 : index
    %6 = vector.load %arg3[%c1_7, %c0_8, %c0_9] : memref<3x1x625xf32, #tpu.memory_space<vmem>>, vector<1x1x625xf32>
    %7 = vector.shape_cast %6 : vector<1x1x625xf32> to vector<1x625xf32>
    %c2 = arith.constant 2 : index
    %c0_10 = arith.constant 0 : index
    %c0_11 = arith.constant 0 : index
    %8 = vector.load %arg2[%c2, %c0_10, %c0_11] : memref<3x1x625xf32, #tpu.memory_space<vmem>>, vector<1x1x625xf32>
    %9 = vector.shape_cast %8 : vector<1x1x625xf32> to vector<1x625xf32>
    %c2_12 = arith.constant 2 : index
    %c0_13 = arith.constant 0 : index
    %c0_14 = arith.constant 0 : index
    %10 = vector.load %arg3[%c2_12, %c0_13, %c0_14] : memref<3x1x625xf32, #tpu.memory_space<vmem>>, vector<1x1x625xf32>
    %11 = vector.shape_cast %10 : vector<1x1x625xf32> to vector<1x625xf32>
    %c0_i32 = arith.constant 0 : i32
    %c8_i32 = arith.constant 8 : i32
    %12 = arith.muli %c0_i32, %c8_i32 : i32
    %13 = tpu.assume_multiple %12, 8 : i32
    %14 = arith.index_cast %13 : i32 to index
    %c0_15 = arith.constant 0 : index
    %15 = vector.load %arg1[%14, %c0_15] : memref<8x625xf32, #tpu.memory_space<vmem>>, vector<8x625xf32>
    %16 = vector.broadcast %1 : vector<1x625xf32> to vector<8x625xf32>
    %17 = arith.mulf %15, %16 : vector<8x625xf32>
    %18 = vector.broadcast %3 : vector<1x625xf32> to vector<8x625xf32>
    %19 = arith.addf %17, %18 : vector<8x625xf32>
    %cst = arith.constant 0.00999999977 : f32
    %20 = vector.broadcast %cst : f32 to vector<8x625xf32>
    %21 = arith.mulf %20, %19 : vector<8x625xf32>
    %22 = arith.maximumf %19, %21 : vector<8x625xf32>
    %23 = vector.broadcast %5 : vector<1x625xf32> to vector<8x625xf32>
    %24 = arith.mulf %22, %23 : vector<8x625xf32>
    %25 = vector.broadcast %7 : vector<1x625xf32> to vector<8x625xf32>
    %26 = arith.addf %24, %25 : vector<8x625xf32>
    %cst_16 = arith.constant 0.00999999977 : f32
    %27 = vector.broadcast %cst_16 : f32 to vector<8x625xf32>
    %28 = arith.mulf %27, %26 : vector<8x625xf32>
    %29 = arith.maximumf %26, %28 : vector<8x625xf32>
    %30 = vector.broadcast %9 : vector<1x625xf32> to vector<8x625xf32>
    %31 = arith.mulf %29, %30 : vector<8x625xf32>
    %32 = vector.broadcast %11 : vector<1x625xf32> to vector<8x625xf32>
    %33 = arith.addf %31, %32 : vector<8x625xf32>
    %cst_17 = arith.constant 0.00999999977 : f32
    %34 = vector.broadcast %cst_17 : f32 to vector<8x625xf32>
    %35 = arith.mulf %34, %33 : vector<8x625xf32>
    %36 = arith.maximumf %33, %35 : vector<8x625xf32>
    %37 = arith.index_cast %13 : i32 to index
    %c0_18 = arith.constant 0 : index
    %38 = vector.load %arg4[%37, %c0_18] : memref<8x625xf32, #tpu.memory_space<vmem>>, vector<8x625xf32>
    tpu.vector_store %arg4[%37, %c0_18], %36 {strides = array<i32>} : memref<8x625xf32, #tpu.memory_space<vmem>>, vector<8x625xf32>,
    %c1_i32 = arith.constant 1 : i32
    return
  }
  func.func @transform_0(%arg0: i32) -> (i32, i32) {
    %c0_i32 = arith.constant 0 : i32
    %c0_i32_0 = arith.constant 0 : i32
    return %arg0, %c0_i32 : i32, i32
  }
  func.func @transform_1(%arg0: i32) -> (i32, i32, i32) {
    %c0_i32 = arith.constant 0 : i32
    %c0_i32_0 = arith.constant 0 : i32
    %c0_i32_1 = arith.constant 0 : i32
    %c0_i32_2 = arith.constant 0 : i32
    return %c0_i32, %c0_i32_0, %c0_i32_1 : i32, i32, i32
  }
  func.func @transform_2(%arg0: i32) -> (i32, i32, i32) {
    %c0_i32 = arith.constant 0 : i32
    %c0_i32_0 = arith.constant 0 : i32
    %c0_i32_1 = arith.constant 0 : i32
    %c0_i32_2 = arith.constant 0 : i32
    return %c0_i32, %c0_i32_0, %c0_i32_1 : i32, i32, i32
  }
  func.func @transform_3(%arg0: i32) -> (i32, i32) {
    %c0_i32 = arith.constant 0 : i32
    %c0_i32_0 = arith.constant 0 : i32
    return %arg0, %c0_i32 : i32, i32
  }
}

</mosaic_0001>

<llo_original>
// kernel: tpu_custom_call.1
$region0: #{tpu_custom_call.1}
  #allocation0 [shape = 'u32[]', space=smem, size = 0x4, offset = 0x4, fixed_abs, tag = 'smem constant byte address 0x4 - core index']
  #allocation1 [shape = 'u32[144,128]{1,0:T(1,128)}', space=vmem, size = 0x12000, scoped, tag = 'internal scratch']
  %s0 = inlined_call_operand.hbm [shape: f32[8,625], index: 0, kind: input, shape index: {}, may-alias: {0,3}]
  %s1 = inlined_call_operand.vmem [shape: f32[3,1,625], index: 1, kind: input, shape index: {}]
  %s2 = inlined_call_operand.vmem [shape: f32[3,1,625], index: 2, kind: input, shape index: {}]
  %s3 = inlined_call_operand.hbm [shape: f32[8,625], index: 3, kind: output, shape index: {}, may-alias: {0,3}]
  %s4 = sld [smem:[#allocation0]]
  $region26: #{tpu_custom_call.1} parent=0
    _
  %s6 = ssub.s32 1, %s4
  %s7 = scalar_select 0, %s6, %s4
  $region1: #{tpu_custom_call.1} parent=0
    #allocation2 [shape = 'u8[20480]{0}', space=vmem, size = 0x5000, scoped, tag = 'input window, operand 0, single buffered']
    #allocation3 [shape = 's32[1]{0}', space=sflag, size = 0x4, scoped, tag = 'scoped memory for tpu_custom_call.1']
    #allocation4 [shape = 's32[1]{0}', space=sflag, size = 0x4, scoped, tag = 'scoped memory for tpu_custom_call.1']
    #allocation5 [shape = 'u8[20480]{0}', space=vmem, size = 0x5000, scoped, tag = 'output window, operand 0, single buffered']
    %8 = vsyncpa [#allocation3], 0
    %9 = vsyncpa [#allocation4], 0
    // Predicated region
    $region2: #{tpu_custom_call.1} parent=1 // pred_check
      _
    $region3: #{tpu_custom_call.1} parent=1 // pred_check_branch
      %11 = sbr.rel (0) target = $region5
    $region4: #{tpu_custom_call.1} parent=1 // pred_region
      %s13 = ssub.s32 640, 640
      %14 = vsyncadd [#allocation3], %s13
      %s16 = sshll.u32 [#allocation2], 4
      %s17 = int_to_ptr.vmem [resolvable:$true] %s16
      %19 = dma.hbm_to_vmem [thread:$0]  %s0, 640, %s17, [#allocation3]
    $region5: #{tpu_custom_call.1} parent=1 // pred_fallthru
      _
    // Predicated region
    $region6: #{tpu_custom_call.1} parent=1 // pred_check
      _
    $region7: #{tpu_custom_call.1} parent=1 // pred_check_branch
      %21 = sbr.rel (0) target = $region9
    $region8: #{tpu_custom_call.1} parent=1 // pred_region
      _
    $region9: #{tpu_custom_call.1} parent=1 // pred_fallthru
      _
    // Predicated region
    $region10: #{tpu_custom_call.1} parent=1 // pred_check
      _
    $region11: #{tpu_custom_call.1} parent=1 // pred_check_branch
      %23 = sbr.rel (0) target = $region13
    $region12: #{tpu_custom_call.1} parent=1 // pred_region
      _
    $region13: #{tpu_custom_call.1} parent=1 // pred_fallthru
      _
    // Predicated region
    $region14: #{tpu_custom_call.1} parent=1 // pred_check
      _
    $region15: #{tpu_custom_call.1} parent=1 // pred_check_branch
      %25 = sbr.rel (0) target = $region17
    $region16: #{tpu_custom_call.1} parent=1 // pred_region
      %26 = dma.done [#allocation3], 640
    $region17: #{tpu_custom_call.1} parent=1 // pred_fallthru
      _
    %v27 = vld [vmem:[%s1] sm:$0x1f]
    %v28 = vld [vmem:[%s2] sm:$0x1f]
    %s29 = scalar_lea.vmem %s1, 5
    %v30 = vld [vmem:[%s29] sm:$0x1f]
    %s31 = scalar_lea.vmem %s2, 5
    %v32 = vld [vmem:[%s31] sm:$0x1f]
    %s33 = scalar_lea.vmem %s1, 10
    %v34 = vld [vmem:[%s33] sm:$0x1f]
    %s35 = scalar_lea.vmem %s2, 10
    %v36 = vld [vmem:[%s35] sm:$0x1f]
    %s37 = smul.u32 0, 5
    %s38 = smul.addr %s37, 8
    %s39 = scalar_lea.vmem [#allocation2], %s38
    %v40 = vld [vmem:[%s39] sm:$0xff]
    %v41 = vld [vmem:[%s39 + $0x8] sm:$0xff]
    %v42 = vld [vmem:[%s39 + $0x10] sm:$0xff]
    %v43 = vld [vmem:[%s39 + $0x18] sm:$0xff]
    %v44 = vld [vmem:[%s39 + $0x20] sm:$0xff]
    %v46 = vlaneseq
    %v47 = vshrl.u32 %v46, 7
    %v48 = vsub.s32 0, %v47
    %v49 = vrot.slane %v27, %v48
    %v50 = vlaneseq
    %v51 = vshrl.u32 %v50, 7
    %v52 = vsub.s32 1, %v51
    %v53 = vrot.slane %v27, %v52
    %v54 = vlaneseq
    %v55 = vshrl.u32 %v54, 7
    %v56 = vsub.s32 2, %v55
    %v57 = vrot.slane %v27, %v56
    %v58 = vlaneseq
    %v59 = vshrl.u32 %v58, 7
    %v60 = vsub.s32 3, %v59
    %v61 = vrot.slane %v27, %v60
    %v62 = vlaneseq
    %v63 = vshrl.u32 %v62, 7
    %v64 = vsub.s32 4, %v63
    %v65 = vrot.slane %v27, %v64
    %v71 = vmul.f32 %v40, %v49
    %v72 = vmul.f32 %v41, %v53
    %v73 = vmul.f32 %v42, %v57
    %v74 = vmul.f32 %v43, %v61
    %v75 = vmul.f32 %v44, %v65
    %v77 = vlaneseq
    %v78 = vshrl.u32 %v77, 7
    %v79 = vsub.s32 0, %v78
    %v80 = vrot.slane %v28, %v79
    %v81 = vlaneseq
    %v82 = vshrl.u32 %v81, 7
    %v83 = vsub.s32 1, %v82
    %v84 = vrot.slane %v28, %v83
    %v85 = vlaneseq
    %v86 = vshrl.u32 %v85, 7
    %v87 = vsub.s32 2, %v86
    %v88 = vrot.slane %v28, %v87
    %v89 = vlaneseq
    %v90 = vshrl.u32 %v89, 7
    %v91 = vsub.s32 3, %v90
    %v92 = vrot.slane %v28, %v91
    %v93 = vlaneseq
    %v94 = vshrl.u32 %v93, 7
    %v95 = vsub.s32 4, %v94
    %v96 = vrot.slane %v28, %v95
    %v102 = vadd.f32 %v71, %v80
    %v103 = vadd.f32 %v72, %v84
    %v104 = vadd.f32 %v73, %v88
    %v105 = vadd.f32 %v74, %v92
    %v106 = vadd.f32 %v75, %v96
    %v107 = vmul.f32 %v102, 0.01
    %v108 = vmul.f32 %v103, 0.01
    %v109 = vmul.f32 %v104, 0.01
    %v110 = vmul.f32 %v105, 0.01
    %v111 = vmul.f32 %v106, 0.01
    %v112 = vmax.f32 %v102, %v107
    %v113 = vmax.f32 %v103, %v108
    %v114 = vmax.f32 %v104, %v109
    %v115 = vmax.f32 %v105, %v110
    %v116 = vmax.f32 %v106, %v111
    %v118 = vlaneseq
    %v119 = vshrl.u32 %v118, 7
    %v120 = vsub.s32 0, %v119
    %v121 = vrot.slane %v30, %v120
    %v122 = vlaneseq
    %v123 = vshrl.u32 %v122, 7
    %v124 = vsub.s32 1, %v123
    %v125 = vrot.slane %v30, %v124
    %v126 = vlaneseq
    %v127 = vshrl.u32 %v126, 7
    %v128 = vsub.s32 2, %v127
    %v129 = vrot.slane %v30, %v128
    %v130 = vlaneseq
    %v131 = vshrl.u32 %v130, 7
    %v132 = vsub.s32 3, %v131
    %v133 = vrot.slane %v30, %v132
    %v134 = vlaneseq
    %v135 = vshrl.u32 %v134, 7
    %v136 = vsub.s32 4, %v135
    %v137 = vrot.slane %v30, %v136
    %v143 = vmul.f32 %v112, %v121
    %v144 = vmul.f32 %v113, %v125
    %v145 = vmul.f32 %v114, %v129
    %v146 = vmul.f32 %v115, %v133
    %v147 = vmul.f32 %v116, %v137
    %v149 = vlaneseq
    %v150 = vshrl.u32 %v149, 7
    %v151 = vsub.s32 0, %v150
    %v152 = vrot.slane %v32, %v151
    %v153 = vlaneseq
    %v154 = vshrl.u32 %v153, 7
    %v155 = vsub.s32 1, %v154
    %v156 = vrot.slane %v32, %v155
    %v157 = vlaneseq
    %v158 = vshrl.u32 %v157, 7
    %v159 = vsub.s32 2, %v158
    %v160 = vrot.slane %v32, %v159
    %v161 = vlaneseq
    %v162 = vshrl.u32 %v161, 7
    %v163 = vsub.s32 3, %v162
    %v164 = vrot.slane %v32, %v163
    %v165 = vlaneseq
    %v166 = vshrl.u32 %v165, 7
    %v167 = vsub.s32 4, %v166
    %v168 = vrot.slane %v32, %v167
    %v174 = vadd.f32 %v143, %v152
    %v175 = vadd.f32 %v144, %v156
    %v176 = vadd.f32 %v145, %v160
    %v177 = vadd.f32 %v146, %v164
    %v178 = vadd.f32 %v147, %v168
    %v179 = vmul.f32 %v174, 0.01
    %v180 = vmul.f32 %v175, 0.01
    %v181 = vmul.f32 %v176, 0.01
    %v182 = vmul.f32 %v177, 0.01
    %v183 = vmul.f32 %v178, 0.01
    %v184 = vmax.f32 %v174, %v179
    %v185 = vmax.f32 %v175, %v180
    %v186 = vmax.f32 %v176, %v181
    %v187 = vmax.f32 %v177, %v182
    %v188 = vmax.f32 %v178, %v183
    %v190 = vlaneseq
    %v191 = vshrl.u32 %v190, 7
    %v192 = vsub.s32 0, %v191
    %v193 = vrot.slane %v34, %v192
    %v194 = vlaneseq
    %v195 = vshrl.u32 %v194, 7
    %v196 = vsub.s32 1, %v195
    %v197 = vrot.slane %v34, %v196
    %v198 = vlaneseq
    %v199 = vshrl.u32 %v198, 7
    %v200 = vsub.s32 2, %v199
    %v201 = vrot.slane %v34, %v200
    %v202 = vlaneseq
    %v203 = vshrl.u32 %v202, 7
    %v204 = vsub.s32 3, %v203
    %v205 = vrot.slane %v34, %v204
    %v206 = vlaneseq
    %v207 = vshrl.u32 %v206, 7
    %v208 = vsub.s32 4, %v207
    %v209 = vrot.slane %v34, %v208
    %v215 = vmul.f32 %v184, %v193
    %v216 = vmul.f32 %v185, %v197
    %v217 = vmul.f32 %v186, %v201
    %v218 = vmul.f32 %v187, %v205
    %v219 = vmul.f32 %v188, %v209
    %v221 = vlaneseq
    %v222 = vshrl.u32 %v221, 7
    %v223 = vsub.s32 0, %v222
    %v224 = vrot.slane %v36, %v223
    %v225 = vlaneseq
    %v226 = vshrl.u32 %v225, 7
    %v227 = vsub.s32 1, %v226
    %v228 = vrot.slane %v36, %v227
    %v229 = vlaneseq
    %v230 = vshrl.u32 %v229, 7
    %v231 = vsub.s32 2, %v230
    %v232 = vrot.slane %v36, %v231
    %v233 = vlaneseq
    %v234 = vshrl.u32 %v233, 7
    %v235 = vsub.s32 3, %v234
    %v236 = vrot.slane %v36, %v235
    %v237 = vlaneseq
    %v238 = vshrl.u32 %v237, 7
    %v239 = vsub.s32 4, %v238
    %v240 = vrot.slane %v36, %v239
    %v246 = vadd.f32 %v215, %v224
    %v247 = vadd.f32 %v216, %v228
    %v248 = vadd.f32 %v217, %v232
    %v249 = vadd.f32 %v218, %v236
    %v250 = vadd.f32 %v219, %v240
    %v251 = vmul.f32 %v246, 0.01
    %v252 = vmul.f32 %v247, 0.01
    %v253 = vmul.f32 %v248, 0.01
    %v254 = vmul.f32 %v249, 0.01
    %v255 = vmul.f32 %v250, 0.01
    %v256 = vmax.f32 %v246, %v251
    %v257 = vmax.f32 %v247, %v252
    %v258 = vmax.f32 %v248, %v253
    %v259 = vmax.f32 %v249, %v254
    %v260 = vmax.f32 %v250, %v255
    %s261 = smul.addr %s37, 8
    %s262 = scalar_lea.vmem [#allocation5], %s261
    %263 = vst [vmem:[%s262] sm:$0xff] %v256
    %264 = vst [vmem:[%s262 + $0x8] sm:$0xff] %v257
    %265 = vst [vmem:[%s262 + $0x10] sm:$0xff] %v258
    %266 = vst [vmem:[%s262 + $0x18] sm:$0xff] %v259
    %vm267 = vcmask 924672
    %268 = vst.msk [vmem:[%s262 + $0x20] sm:$0xff] %vm267, %v260
    // Predicated region
    $region18: #{tpu_custom_call.1} parent=1 // pred_check
      _
    $region19: #{tpu_custom_call.1} parent=1 // pred_check_branch
      %270 = sbr.rel (0) target = $region21
    $region20: #{tpu_custom_call.1} parent=1 // pred_region
      %s272 = ssub.s32 640, 640
      %273 = vsyncadd [#allocation4], %s272
      %s275 = sshll.u32 [#allocation5], 4
      %s276 = int_to_ptr.vmem [resolvable:$true] %s275
      %278 = dma.vmem_to_hbm [thread:$0]  %s276, 640, %s3, [#allocation4]
    $region21: #{tpu_custom_call.1} parent=1 // pred_fallthru
      _
    // Predicated region
    $region22: #{tpu_custom_call.1} parent=1 // pred_check
      _
    $region23: #{tpu_custom_call.1} parent=1 // pred_check_branch
      %280 = sbr.rel (0) target = $region25
    $region24: #{tpu_custom_call.1} parent=1 // pred_region
      %281 = dma.done [#allocation4], 640
    $region25: #{tpu_custom_call.1} parent=1 // pred_fallthru
      _
    %282 = vsyncpa [#allocation3], 1
    %283 = vsyncpa [#allocation4], 1

</llo_original>
